<compile_context>
chip_gen: v5e
topology: v5e:2x2
jax: 0.10.0
libtpu: 0.0.40
codegen_flags: <defaults>
</compile_context>

<pallas_src>
import functools
import math

import jax
import jax.numpy as jnp
import numpy as np
from jax import lax
from jax.experimental import pallas as pl
from jax.experimental.pallas import tpu as pltpu


def _qkv_attn_kernel(qkv_ref, o_ref, *, ch, scale_sq):
    # qkv_ref: [G, 3*ch, T] block for G (batch, head) pairs; o_ref: [G, ch, T].
    q = qkv_ref[:, 0 * ch:1 * ch, :]          # [G, ch, T]
    k = qkv_ref[:, 1 * ch:2 * ch, :]          # [G, ch, T]
    v = qkv_ref[:, 2 * ch:3 * ch, :]          # [G, ch, T]

    # Apply the combined scale (scale*scale = 1/sqrt(ch)) once, to q only.
    q = q * jnp.asarray(scale_sq, dtype=q.dtype)

    # w[g, t, s] = sum_c q[g, c, t] * k[g, c, s]   (einsum 'gct,gcs->gts')
    # expressed directly as a contraction over ch -- no explicit q.T temp.
    w = lax.dot_general(
        q, k,
        dimension_numbers=(((1,), (1,)), ((0,), (0,))),
        preferred_element_type=jnp.float32)   # [G, T, T] f32

    # softmax over the key axis, in float32 (matches torch `.float()`).
    w = w - jnp.max(w, axis=-1, keepdims=True)
    w = jnp.exp(w)
    w = w * pl.reciprocal(jnp.sum(w, axis=-1, keepdims=True), approx=True)

    # torch downcasts the probabilities to the input dtype before the PV
    # matmul (`.type(weight.dtype)`); no-op for f32 inputs.
    p = w.astype(v.dtype)

    # a[g, c, t] = sum_s v[g, c, s] * p[g, t, s]   (einsum 'gts,gcs->gct')
    # contraction over the key axis of both operands -- no explicit w.T temp.
    a = lax.dot_general(
        v, p,
        dimension_numbers=(((2,), (2,)), ((0,), (0,))),
        preferred_element_type=jnp.float32)   # [G, ch, T] f32

    o_ref[...] = a.astype(o_ref.dtype)


def _vmem_limit_bytes():
    # Raise the scoped VMEM limit above the 16/32 MiB defaults but stay well
    # below physical capacity (128 MiB v5e/v6e, 64 MiB per TC on v7x).
    try:
        cap = pltpu.get_tpu_info().vmem_capacity_bytes
    except Exception:
        cap = 64 * 1024 * 1024
    return int(min(100 * 1024 * 1024, cap * 3 // 4))


def _choose_group_size(BH, ch, T, itemsize, vmem_budget, max_group_size=None):
    # Per-head VMEM cost: double-buffered input/output blocks plus the f32
    # temporaries ([T,T] scores/probs, [ch,T] accumulator/result).
    per_head = (2 * (3 * ch * T + ch * T) * itemsize
                + (2 * T * T + 2 * ch * T) * 4)
    g = max(1, int(vmem_budget // max(per_head, 1)))
    g = min(g, BH)
    if max_group_size is not None:
        g = min(g, max_group_size)
    g = max(g, 1)
    while BH % g != 0:       # keep the grid exact
        g -= 1
    return g


def qkv_attention_legacy(qkv, n_heads, *, max_group_size=None):
    """qkv: [B, 3*C, T] -> [B, C, T]   (C = n_heads * ch)."""
    B, width, T = qkv.shape
    assert width % (3 * n_heads) == 0
    ch = width // (3 * n_heads)
    BH = B * n_heads

    # No-copy reshape: the channel axis is laid out as [H, 3, ch], exactly as
    # torch's qkv.reshape(B*H, 3*ch, T).  q/k/v are sliced inside the kernel.
    qkv_r = qkv.reshape(BH, 3 * ch, T)

    vmem_limit = _vmem_limit_bytes()
    G = _choose_group_size(BH, ch, T, qkv.dtype.itemsize,
                           vmem_budget=vmem_limit // 2,
                           max_group_size=max_group_size)

    scale_sq = 1.0 / math.sqrt(ch)            # (1/ch**0.25)**2

    out = pl.pallas_call(
        functools.partial(_qkv_attn_kernel, ch=ch, scale_sq=scale_sq),
        out_shape=jax.ShapeDtypeStruct((BH, ch, T), qkv.dtype),
        grid_spec=pltpu.PrefetchScalarGridSpec(
            num_scalar_prefetch=0,
            grid=(BH // G,),
            in_specs=[pl.BlockSpec((G, 3 * ch, T), lambda g: (g, 0, 0))],
            out_specs=pl.BlockSpec((G, ch, T), lambda g: (g, 0, 0)),
        ),
        compiler_params=pltpu.CompilerParams(
            dimension_semantics=("parallel",),
            vmem_limit_bytes=vmem_limit,
        ),
    )(qkv_r)

    return out.reshape(B, n_heads * ch, T)


def _reference(qkv, n_heads):
    """Pure-JAX reference mirroring the torch forward exactly."""
    B, width, T = qkv.shape
    ch = width // (3 * n_heads)
    qkv_r = qkv.reshape(B * n_heads, 3 * ch, T)
    q, k, v = qkv_r[:, :ch], qkv_r[:, ch:2 * ch], qkv_r[:, 2 * ch:]
    scale = 1.0 / math.sqrt(math.sqrt(ch))
    w = jnp.einsum('bct,bcs->bts', q * scale, k * scale)
    w = jax.nn.softmax(w.astype(jnp.float32), axis=-1).astype(w.dtype)
    a = jnp.einsum('bts,bcs->bct', w, v)
    return a.reshape(B, -1, T)


def _check(B, n_heads, ch, T, key, **kw):
    qkv = jax.random.normal(key, (B, 3 * n_heads * ch, T), dtype=jnp.float32)
    out = jax.block_until_ready(qkv_attention_legacy(qkv, n_heads, **kw))
    ref = _reference(qkv, n_heads)
    assert out.shape == (B, n_heads * ch, T)
    # tolerance loosened vs 1e-5 because of pl.reciprocal(approx=True)
    np.testing.assert_allclose(np.asarray(out), np.asarray(ref),
                               atol=2e-3, rtol=2e-3)


if __name__ == "__main__":
    key = jax.random.PRNGKey(0)
    k0, k1, k2 = jax.random.split(key, 3)

    # small shape from the original spec: B=2, H=2, ch=16, T=8 (width = 96)
    _check(2, 2, 16, 8, k0)
    # same shape but force G=1 so the multi-step grid path is exercised
    _check(2, 2, 16, 8, k1, max_group_size=1)
    # lane-aligned shape: T a multiple of 128, ch a multiple of 8
    _check(1, 4, 32, 128, k2)

    print("KERNEL_OK")
</pallas_src>

<mosaic_0001>
module attributes {stable_mosaic.version = 11 : i64} {
  func.func @_qkv_attn_kernel(%arg0: i32, %arg1: memref<4x48x8xf32, #tpu.memory_space<vmem>>, %arg2: memref<4x16x8xf32, #tpu.memory_space<vmem>>) attributes {dimension_semantics = [#tpu.dimension_semantics<parallel>], iteration_bounds = array<i64: 1>, scalar_prefetch = 0 : i64, scratch_operands = 0 : i64, tpu.core_type = #tpu.core_type<tc>, window_params = [{transform_indices = @transform_0, window_bounds = array<i64: 4, 48, 8>}, {transform_indices = @transform_1, window_bounds = array<i64: 4, 16, 8>}]} {
    %c0 = arith.constant 0 : index
    %c0_0 = arith.constant 0 : index
    %c0_1 = arith.constant 0 : index
    %0 = vector.load %arg1[%c0, %c0_0, %c0_1] : memref<4x48x8xf32, #tpu.memory_space<vmem>>, vector<4x16x8xf32>
    %c0_2 = arith.constant 0 : index
    %c16 = arith.constant 16 : index
    %c0_3 = arith.constant 0 : index
    %1 = vector.load %arg1[%c0_2, %c16, %c0_3] : memref<4x48x8xf32, #tpu.memory_space<vmem>>, vector<4x16x8xf32>
    %c0_4 = arith.constant 0 : index
    %c32 = arith.constant 32 : index
    %c0_5 = arith.constant 0 : index
    %2 = vector.load %arg1[%c0_4, %c32, %c0_5] : memref<4x48x8xf32, #tpu.memory_space<vmem>>, vector<4x16x8xf32>
    %cst = arith.constant 2.500000e-01 : f32
    %3 = vector.broadcast %cst : f32 to vector<4x16x8xf32>
    %4 = arith.mulf %0, %3 : vector<4x16x8xf32>
    %cst_6 = arith.constant dense<0.000000e+00> : vector<4x8x8xf32>
    %5 = tpu.matmul %4, %1, %cst_6 {dimension_numbers = #tpu.dot_dimension_numbers<[1], [1], [2], [2], [0, 0, 0, 2, 1, 2], [0], [0]>} : vector<4x16x8xf32>, vector<4x16x8xf32>, vector<4x8x8xf32> -> vector<4x8x8xf32>
    %cst_7 = arith.constant dense<0xFF800000> : vector<4x8xf32>
    %6 = vector.multi_reduction <maximumf>, %5, %cst_7 [2] : vector<4x8x8xf32> to vector<4x8xf32>
    %7 = vector.shape_cast %6 : vector<4x8xf32> to vector<4x8x1xf32>
    %8 = vector.broadcast %7 : vector<4x8x1xf32> to vector<4x8x8xf32>
    %9 = arith.subf %5, %8 : vector<4x8x8xf32>
    %10 = math.exp %9 : vector<4x8x8xf32>
    %cst_8 = arith.constant dense<0.000000e+00> : vector<4x8xf32>
    %11 = vector.multi_reduction <add>, %10, %cst_8 [2] : vector<4x8x8xf32> to vector<4x8xf32>
    %12 = vector.shape_cast %11 : vector<4x8xf32> to vector<4x8x1xf32>
    %13 = tpu.reciprocal %12 {approx = true} : vector<4x8x1xf32> -> vector<4x8x1xf32>
    %14 = vector.broadcast %13 : vector<4x8x1xf32> to vector<4x8x8xf32>
    %15 = arith.mulf %10, %14 : vector<4x8x8xf32>
    %cst_9 = arith.constant dense<0.000000e+00> : vector<4x16x8xf32>
    %16 = tpu.matmul %2, %15, %cst_9 {dimension_numbers = #tpu.dot_dimension_numbers<[2], [2], [1], [1], [0, 0, 0, 1, 1, 1], [0], [0]>} : vector<4x16x8xf32>, vector<4x8x8xf32>, vector<4x16x8xf32> -> vector<4x16x8xf32>
    %c0_10 = arith.constant 0 : index
    %c0_11 = arith.constant 0 : index
    %c0_12 = arith.constant 0 : index
    %17 = vector.load %arg2[%c0_10, %c0_11, %c0_12] : memref<4x16x8xf32, #tpu.memory_space<vmem>>, vector<4x16x8xf32>
    tpu.vector_store %arg2[%c0_10, %c0_11, %c0_12], %16 {strides = array<i32>} : memref<4x16x8xf32, #tpu.memory_space<vmem>>, vector<4x16x8xf32>,
    return
  }
  func.func @transform_0(%arg0: i32) -> (i32, i32, i32) {
    %c0_i32 = arith.constant 0 : i32
    %c0_i32_0 = arith.constant 0 : i32
    %c0_i32_1 = arith.constant 0 : i32
    return %arg0, %c0_i32, %c0_i32_0 : i32, i32, i32
  }
  func.func @transform_1(%arg0: i32) -> (i32, i32, i32) {
    %c0_i32 = arith.constant 0 : i32
    %c0_i32_0 = arith.constant 0 : i32
    %c0_i32_1 = arith.constant 0 : i32
    return %arg0, %c0_i32, %c0_i32_0 : i32, i32, i32
  }
}

</mosaic_0001>

<llo_original>
// kernel: tpu_custom_call.1
$region0: #{tpu_custom_call.1}
  #allocation0 [shape = 'u32[]', space=smem, size = 0x4, offset = 0x4, fixed_abs, tag = 'smem constant byte address 0x4 - core index']
  #allocation1 [shape = 'u32[72,128]{1,0:T(1,128)}', space=vmem, size = 0x9000, scoped, tag = 'internal scratch']
  %s0 = inlined_call_operand.vmem [shape: f32[4,48,8], index: 0, kind: input, shape index: {}]
  %s1 = inlined_call_operand.vmem [shape: f32[4,16,8], index: 1, kind: output, shape index: {}]
  %s2 = sld [smem:[#allocation0]]
  $region14: #{tpu_custom_call.1} parent=0
    _
  %s4 = ssub.s32 1, %s2
  %s5 = scalar_select 0, %s4, %s2
  // Predicated region
  $region2: #{tpu_custom_call.1} parent=0 // pred_check
    _
  $region3: #{tpu_custom_call.1} parent=0 // pred_check_branch
    %7 = sbr.rel (0) target = $region5
  $region4: #{tpu_custom_call.1} parent=0 // pred_region
    _
  $region5: #{tpu_custom_call.1} parent=0 // pred_fallthru
    _
  %v8 = vld [vmem:[%s0] sm:$0xff]
  %v9 = vld [vmem:[%s0 + $0x8] sm:$0xff]
  %v10 = vld [vmem:[%s0 + $0x30] sm:$0xff]
  %v11 = vld [vmem:[%s0 + $0x38] sm:$0xff]
  %v12 = vld [vmem:[%s0 + $0x60] sm:$0xff]
  %v13 = vld [vmem:[%s0 + $0x68] sm:$0xff]
  %v14 = vld [vmem:[%s0 + $0x90] sm:$0xff]
  %v15 = vld [vmem:[%s0 + $0x98] sm:$0xff]
  %v16 = vld [vmem:[%s0 + $0x10] sm:$0xff]
  %v17 = vld [vmem:[%s0 + $0x18] sm:$0xff]
  %v18 = vld [vmem:[%s0 + $0x40] sm:$0xff]
  %v19 = vld [vmem:[%s0 + $0x48] sm:$0xff]
  %v20 = vld [vmem:[%s0 + $0x70] sm:$0xff]
  %v21 = vld [vmem:[%s0 + $0x78] sm:$0xff]
  %v22 = vld [vmem:[%s0 + $0xa0] sm:$0xff]
  %v23 = vld [vmem:[%s0 + $0xa8] sm:$0xff]
  %v24 = vld [vmem:[%s0 + $0x20] sm:$0xff]
  %v25 = vld [vmem:[%s0 + $0x28] sm:$0xff]
  %v26 = vld [vmem:[%s0 + $0x50] sm:$0xff]
  %v27 = vld [vmem:[%s0 + $0x58] sm:$0xff]
  %v28 = vld [vmem:[%s0 + $0x80] sm:$0xff]
  %v29 = vld [vmem:[%s0 + $0x88] sm:$0xff]
  %v30 = vld [vmem:[%s0 + $0xb0] sm:$0xff]
  %v31 = vld [vmem:[%s0 + $0xb8] sm:$0xff]
  %v32 = vmul.f32 %v8, 0.25
  %v33 = vmul.f32 %v9, 0.25
  %v34 = vmul.f32 %v10, 0.25
  %v35 = vmul.f32 %v11, 0.25
  %v36 = vmul.f32 %v12, 0.25
  %v37 = vmul.f32 %v13, 0.25
  %v38 = vmul.f32 %v14, 0.25
  %v39 = vmul.f32 %v15, 0.25
  %40 = vxpose.xlu0.b32.start [1/16] %v32, 128
  %41 = vxpose.xlu0.b32.cont [2/16] %v33, 128
  %42 = vxpose.xlu0.b32.cont [3/16] 0.0, 128
  %43 = vxpose.xlu0.b32.cont [4/16] 0.0, 128
  %44 = vxpose.xlu0.b32.cont [5/16] 0.0, 128
  %45 = vxpose.xlu0.b32.cont [6/16] 0.0, 128
  %46 = vxpose.xlu0.b32.cont [7/16] 0.0, 128
  %47 = vxpose.xlu0.b32.cont [8/16] 0.0, 128
  %48 = vxpose.xlu0.b32.cont [9/16] 0.0, 128
  %49 = vxpose.xlu0.b32.cont [10/16] 0.0, 128
  %50 = vxpose.xlu0.b32.cont [11/16] 0.0, 128
  %51 = vxpose.xlu0.b32.cont [12/16] 0.0, 128
  %52 = vxpose.xlu0.b32.cont [13/16] 0.0, 128
  %53 = vxpose.xlu0.b32.cont [14/16] 0.0, 128
  %54 = vxpose.xlu0.b32.cont [15/16] 0.0, 128
  %55 = vxpose.xlu0.b32.end [16/16] 0.0, 128
  %v56 = vpop.trf.xlu0
  %v57 = vpop.trf.xlu0
  %v58 = vpop.trf.xlu0
  %v59 = vpop.trf.xlu0
  %v60 = vpop.trf.xlu0
  %v61 = vpop.trf.xlu0
  %v62 = vpop.trf.xlu0
  %v63 = vpop.trf.xlu0
  %v64 = vpop.trf.xlu0
  %v65 = vpop.trf.xlu0
  %v66 = vpop.trf.xlu0
  %v67 = vpop.trf.xlu0
  %v68 = vpop.trf.xlu0
  %v69 = vpop.trf.xlu0
  %v70 = vpop.trf.xlu0
  %v71 = vpop.trf.xlu0
  %vm72 = vcmask 130048
  %v74 = vsel %vm72, %v56, 0
  %76 = vmatpush.msra.mxu0 0.0
  %77 = vmatpush.msra.mxu0 0.0
  %78 = vmatpush.msra.mxu0 0.0
  %79 = vmatpush.msra.mxu0 0.0
  %80 = vmatpush.msra.mxu0 0.0
  %81 = vmatpush.msra.mxu0 0.0
  %82 = vmatpush.msra.mxu0 0.0
  %83 = vmatpush.msra.mxu0 0.0
  %84 = vmatpush.msra.mxu0 0.0
  %85 = vmatpush.msra.mxu0 0.0
  %86 = vmatpush.msra.mxu0 0.0
  %87 = vmatpush.msra.mxu0 0.0
  %88 = vmatpush.msra.mxu0 0.0
  %89 = vmatpush.msra.mxu0 0.0
  %90 = vmatpush.msra.mxu0 %v17
  %91 = vmatpush.msra.mxu0 %v16
  %92 = vmatmul.f32.gmra.mxu0 %v74
  %v93 = vpop.f32.mrf.mxu0
  %v94 = vadd.f32 0.0, %v93
  %95 = vdwg.mxu0
  %96 = vxpose.xlu0.b32.start [1/16] %v34, 128
  %97 = vxpose.xlu0.b32.cont [2/16] %v35, 128
  %98 = vxpose.xlu0.b32.cont [3/16] 0.0, 128
  %99 = vxpose.xlu0.b32.cont [4/16] 0.0, 128
  %100 = vxpose.xlu0.b32.cont [5/16] 0.0, 128
  %101 = vxpose.xlu0.b32.cont [6/16] 0.0, 128
  %102 = vxpose.xlu0.b32.cont [7/16] 0.0, 128
  %103 = vxpose.xlu0.b32.cont [8/16] 0.0, 128
  %104 = vxpose.xlu0.b32.cont [9/16] 0.0, 128
  %105 = vxpose.xlu0.b32.cont [10/16] 0.0, 128
  %106 = vxpose.xlu0.b32.cont [11/16] 0.0, 128
  %107 = vxpose.xlu0.b32.cont [12/16] 0.0, 128
  %108 = vxpose.xlu0.b32.cont [13/16] 0.0, 128
  %109 = vxpose.xlu0.b32.cont [14/16] 0.0, 128
  %110 = vxpose.xlu0.b32.cont [15/16] 0.0, 128
  %111 = vxpose.xlu0.b32.end [16/16] 0.0, 128
  %v112 = vpop.trf.xlu0
  %v113 = vpop.trf.xlu0
  %v114 = vpop.trf.xlu0
  %v115 = vpop.trf.xlu0
  %v116 = vpop.trf.xlu0
  %v117 = vpop.trf.xlu0
  %v118 = vpop.trf.xlu0
  %v119 = vpop.trf.xlu0
  %v120 = vpop.trf.xlu0
  %v121 = vpop.trf.xlu0
  %v122 = vpop.trf.xlu0
  %v123 = vpop.trf.xlu0
  %v124 = vpop.trf.xlu0
  %v125 = vpop.trf.xlu0
  %v126 = vpop.trf.xlu0
  %v127 = vpop.trf.xlu0
  %v129 = vsel %vm72, %v112, 0
  %131 = vmatpush.msra.mxu0 0.0
  %132 = vmatpush.msra.mxu0 0.0
  %133 = vmatpush.msra.mxu0 0.0
  %134 = vmatpush.msra.mxu0 0.0
  %135 = vmatpush.msra.mxu0 0.0
  %136 = vmatpush.msra.mxu0 0.0
  %137 = vmatpush.msra.mxu0 0.0
  %138 = vmatpush.msra.mxu0 0.0
  %139 = vmatpush.msra.mxu0 0.0
  %140 = vmatpush.msra.mxu0 0.0
  %141 = vmatpush.msra.mxu0 0.0
  %142 = vmatpush.msra.mxu0 0.0
  %143 = vmatpush.msra.mxu0 0.0
  %144 = vmatpush.msra.mxu0 0.0
  %145 = vmatpush.msra.mxu0 %v19
  %146 = vmatpush.msra.mxu0 %v18
  %147 = vmatmul.f32.gmra.mxu0 %v129
  %v148 = vpop.f32.mrf.mxu0
  %v149 = vadd.f32 0.0, %v148
  %150 = vdwg.mxu0
  %151 = vxpose.xlu0.b32.start [1/16] %v36, 128
  %152 = vxpose.xlu0.b32.cont [2/16] %v37, 128
  %153 = vxpose.xlu0.b32.cont [3/16] 0.0, 128
  %154 = vxpose.xlu0.b32.cont [4/16] 0.0, 128
  %155 = vxpose.xlu0.b32.cont [5/16] 0.0, 128
  %156 = vxpose.xlu0.b32.cont [6/16] 0.0, 128
  %157 = vxpose.xlu0.b32.cont [7/16] 0.0, 128
  %158 = vxpose.xlu0.b32.cont [8/16] 0.0, 128
  %159 = vxpose.xlu0.b32.cont [9/16] 0.0, 128
  %160 = vxpose.xlu0.b32.cont [10/16] 0.0, 128
  %161 = vxpose.xlu0.b32.cont [11/16] 0.0, 128
  %162 = vxpose.xlu0.b32.cont [12/16] 0.0, 128
  %163 = vxpose.xlu0.b32.cont [13/16] 0.0, 128
  %164 = vxpose.xlu0.b32.cont [14/16] 0.0, 128
  %165 = vxpose.xlu0.b32.cont [15/16] 0.0, 128
  %166 = vxpose.xlu0.b32.end [16/16] 0.0, 128
  %v167 = vpop.trf.xlu0
  %v168 = vpop.trf.xlu0
  %v169 = vpop.trf.xlu0
  %v170 = vpop.trf.xlu0
  %v171 = vpop.trf.xlu0
  %v172 = vpop.trf.xlu0
  %v173 = vpop.trf.xlu0
  %v174 = vpop.trf.xlu0
  %v175 = vpop.trf.xlu0
  %v176 = vpop.trf.xlu0
  %v177 = vpop.trf.xlu0
  %v178 = vpop.trf.xlu0
  %v179 = vpop.trf.xlu0
  %v180 = vpop.trf.xlu0
  %v181 = vpop.trf.xlu0
  %v182 = vpop.trf.xlu0
  %v184 = vsel %vm72, %v167, 0
  %186 = vmatpush.msra.mxu0 0.0
  %187 = vmatpush.msra.mxu0 0.0
  %188 = vmatpush.msra.mxu0 0.0
  %189 = vmatpush.msra.mxu0 0.0
  %190 = vmatpush.msra.mxu0 0.0
  %191 = vmatpush.msra.mxu0 0.0
  %192 = vmatpush.msra.mxu0 0.0
  %193 = vmatpush.msra.mxu0 0.0
  %194 = vmatpush.msra.mxu0 0.0
  %195 = vmatpush.msra.mxu0 0.0
  %196 = vmatpush.msra.mxu0 0.0
  %197 = vmatpush.msra.mxu0 0.0
  %198 = vmatpush.msra.mxu0 0.0
  %199 = vmatpush.msra.mxu0 0.0
  %200 = vmatpush.msra.mxu0 %v21
  %201 = vmatpush.msra.mxu0 %v20
  %202 = vmatmul.f32.gmra.mxu0 %v184
  %v203 = vpop.f32.mrf.mxu0
  %v204 = vadd.f32 0.0, %v203
  %205 = vdwg.mxu0
  %206 = vxpose.xlu0.b32.start [1/16] %v38, 128
  %207 = vxpose.xlu0.b32.cont [2/16] %v39, 128
  %208 = vxpose.xlu0.b32.cont [3/16] 0.0, 128
  %209 = vxpose.xlu0.b32.cont [4/16] 0.0, 128
  %210 = vxpose.xlu0.b32.cont [5/16] 0.0, 128
  %211 = vxpose.xlu0.b32.cont [6/16] 0.0, 128
  %212 = vxpose.xlu0.b32.cont [7/16] 0.0, 128
  %213 = vxpose.xlu0.b32.cont [8/16] 0.0, 128
  %214 = vxpose.xlu0.b32.cont [9/16] 0.0, 128
  %215 = vxpose.xlu0.b32.cont [10/16] 0.0, 128
  %216 = vxpose.xlu0.b32.cont [11/16] 0.0, 128
  %217 = vxpose.xlu0.b32.cont [12/16] 0.0, 128
  %218 = vxpose.xlu0.b32.cont [13/16] 0.0, 128
  %219 = vxpose.xlu0.b32.cont [14/16] 0.0, 128
  %220 = vxpose.xlu0.b32.cont [15/16] 0.0, 128
  %221 = vxpose.xlu0.b32.end [16/16] 0.0, 128
  %v222 = vpop.trf.xlu0
  %v223 = vpop.trf.xlu0
  %v224 = vpop.trf.xlu0
  %v225 = vpop.trf.xlu0
  %v226 = vpop.trf.xlu0
  %v227 = vpop.trf.xlu0
  %v228 = vpop.trf.xlu0
  %v229 = vpop.trf.xlu0
  %v230 = vpop.trf.xlu0
  %v231 = vpop.trf.xlu0
  %v232 = vpop.trf.xlu0
  %v233 = vpop.trf.xlu0
  %v234 = vpop.trf.xlu0
  %v235 = vpop.trf.xlu0
  %v236 = vpop.trf.xlu0
  %v237 = vpop.trf.xlu0
  %v239 = vsel %vm72, %v222, 0
  %241 = vmatpush.msra.mxu0 0.0
  %242 = vmatpush.msra.mxu0 0.0
  %243 = vmatpush.msra.mxu0 0.0
  %244 = vmatpush.msra.mxu0 0.0
  %245 = vmatpush.msra.mxu0 0.0
  %246 = vmatpush.msra.mxu0 0.0
  %247 = vmatpush.msra.mxu0 0.0
  %248 = vmatpush.msra.mxu0 0.0
  %249 = vmatpush.msra.mxu0 0.0
  %250 = vmatpush.msra.mxu0 0.0
  %251 = vmatpush.msra.mxu0 0.0
  %252 = vmatpush.msra.mxu0 0.0
  %253 = vmatpush.msra.mxu0 0.0
  %254 = vmatpush.msra.mxu0 0.0
  %255 = vmatpush.msra.mxu0 %v23
  %256 = vmatpush.msra.mxu0 %v22
  %257 = vmatmul.f32.gmra.mxu0 %v239
  %v258 = vpop.f32.mrf.mxu0
  %v259 = vadd.f32 0.0, %v258
  %260 = vdwg.mxu0
  %vm261 = vcmask 64512
  %v262 = vsel %vm261, %v94, -inf
  %263 = vmax.xlane.f32.xlu0 %v262
  %v264 = vpop.xlane.xlu0 %263
  %v265 = vsel %vm261, %v149, -inf
  %266 = vmax.xlane.f32.xlu0 %v265
  %v267 = vpop.xlane.xlu0 %266
  %v268 = vsel %vm261, %v204, -inf
  %269 = vmax.xlane.f32.xlu0 %v268
  %v270 = vpop.xlane.xlu0 %269
  %v271 = vsel %vm261, %v259, -inf
  %272 = vmax.xlane.f32.xlu0 %v271
  %v273 = vpop.xlane.xlu0 %272
  %v274 = vsub.f32 %v94, %v264
  %v275 = vsub.f32 %v149, %v267
  %v276 = vsub.f32 %v204, %v270
  %v277 = vsub.f32 %v259, %v273
  %v278 = vmul.f32 %v274, 1.442695
  %v279 = vpow.pop %v278
  %v280 = vmul.f32 %v275, 1.442695
  %v281 = vpow.pop %v280
  %v282 = vmul.f32 %v276, 1.442695
  %v283 = vpow.pop %v282
  %v284 = vmul.f32 %v277, 1.442695
  %v285 = vpow.pop %v284
  %v286 = vsel %vm261, %v279, 0.0
  %287 = vadd.xlane.f32.xlu0 %v286
  %v288 = vpop.xlane.xlu0 %287
  %v289 = vsel %vm261, %v281, 0.0
  %290 = vadd.xlane.f32.xlu0 %v289
  %v291 = vpop.xlane.xlu0 %290
  %v292 = vsel %vm261, %v283, 0.0
  %293 = vadd.xlane.f32.xlu0 %v292
  %v294 = vpop.xlane.xlu0 %293
  %v295 = vsel %vm261, %v285, 0.0
  %296 = vadd.xlane.f32.xlu0 %v295
  %v297 = vpop.xlane.xlu0 %296
  %v298 = vrcp.pop %v288
  %v299 = vrcp.pop %v291
  %v300 = vrcp.pop %v294
  %v301 = vrcp.pop %v297
  %v302 = vmul.f32 %v279, %v298
  %v303 = vmul.f32 %v281, %v299
  %v304 = vmul.f32 %v283, %v300
  %v305 = vmul.f32 %v285, %v301
  %v307 = vsel %vm261, %v24, 0
  %v310 = vsel %vm261, %v25, 0
  %v313 = vsel %vm261, %v302, 0
  %315 = vmatpush.xpose.msra.mxu0 0.0
  %316 = vmatpush.xpose.msra.mxu0 0.0
  %317 = vmatpush.xpose.msra.mxu0 0.0
  %318 = vmatpush.xpose.msra.mxu0 0.0
  %319 = vmatpush.xpose.msra.mxu0 0.0
  %320 = vmatpush.xpose.msra.mxu0 0.0
  %321 = vmatpush.xpose.msra.mxu0 0.0
  %322 = vmatpush.xpose.msra.mxu0 0.0
  %323 = vmatpush.xpose.msra.mxu0 0.0
  %324 = vmatpush.xpose.msra.mxu0 0.0
  %325 = vmatpush.xpose.msra.mxu0 0.0
  %326 = vmatpush.xpose.msra.mxu0 0.0
  %327 = vmatpush.xpose.msra.mxu0 0.0
  %328 = vmatpush.xpose.msra.mxu0 0.0
  %329 = vmatpush.xpose.msra.mxu0 0.0
  %330 = vmatpush.xpose.msra.mxu0 %v313
  %331 = vmatmul.f32.gmra.mxu0 %v307
  %v332 = vpop.f32.mrf.mxu0
  %v333 = vadd.f32 0.0, %v332
  %334 = vmatmul.f32.gmra.mxu0 %v310
  %v335 = vpop.f32.mrf.mxu0
  %v336 = vadd.f32 0.0, %v335
  %337 = vdwg.mxu0
  %v339 = vsel %vm261, %v26, 0
  %v342 = vsel %vm261, %v27, 0
  %v345 = vsel %vm261, %v303, 0
  %347 = vmatpush.xpose.msra.mxu0 0.0
  %348 = vmatpush.xpose.msra.mxu0 0.0
  %349 = vmatpush.xpose.msra.mxu0 0.0
  %350 = vmatpush.xpose.msra.mxu0 0.0
  %351 = vmatpush.xpose.msra.mxu0 0.0
  %352 = vmatpush.xpose.msra.mxu0 0.0
  %353 = vmatpush.xpose.msra.mxu0 0.0
  %354 = vmatpush.xpose.msra.mxu0 0.0
  %355 = vmatpush.xpose.msra.mxu0 0.0
  %356 = vmatpush.xpose.msra.mxu0 0.0
  %357 = vmatpush.xpose.msra.mxu0 0.0
  %358 = vmatpush.xpose.msra.mxu0 0.0
  %359 = vmatpush.xpose.msra.mxu0 0.0
  %360 = vmatpush.xpose.msra.mxu0 0.0
  %361 = vmatpush.xpose.msra.mxu0 0.0
  %362 = vmatpush.xpose.msra.mxu0 %v345
  %363 = vmatmul.f32.gmra.mxu0 %v339
  %v364 = vpop.f32.mrf.mxu0
  %v365 = vadd.f32 0.0, %v364
  %366 = vmatmul.f32.gmra.mxu0 %v342
  %v367 = vpop.f32.mrf.mxu0
  %v368 = vadd.f32 0.0, %v367
  %369 = vdwg.mxu0
  %v371 = vsel %vm261, %v28, 0
  %v374 = vsel %vm261, %v29, 0
  %v377 = vsel %vm261, %v304, 0
  %379 = vmatpush.xpose.msra.mxu0 0.0
  %380 = vmatpush.xpose.msra.mxu0 0.0
  %381 = vmatpush.xpose.msra.mxu0 0.0
  %382 = vmatpush.xpose.msra.mxu0 0.0
  %383 = vmatpush.xpose.msra.mxu0 0.0
  %384 = vmatpush.xpose.msra.mxu0 0.0
  %385 = vmatpush.xpose.msra.mxu0 0.0
  %386 = vmatpush.xpose.msra.mxu0 0.0
  %387 = vmatpush.xpose.msra.mxu0 0.0
  %388 = vmatpush.xpose.msra.mxu0 0.0
  %389 = vmatpush.xpose.msra.mxu0 0.0
  %390 = vmatpush.xpose.msra.mxu0 0.0
  %391 = vmatpush.xpose.msra.mxu0 0.0
  %392 = vmatpush.xpose.msra.mxu0 0.0
  %393 = vmatpush.xpose.msra.mxu0 0.0
  %394 = vmatpush.xpose.msra.mxu0 %v377
  %395 = vmatmul.f32.gmra.mxu0 %v371
  %v396 = vpop.f32.mrf.mxu0
  %v397 = vadd.f32 0.0, %v396
  %398 = vmatmul.f32.gmra.mxu0 %v374
  %v399 = vpop.f32.mrf.mxu0
  %v400 = vadd.f32 0.0, %v399
  %401 = vdwg.mxu0
  %v403 = vsel %vm261, %v30, 0
  %v406 = vsel %vm261, %v31, 0
  %v409 = vsel %vm261, %v305, 0
  %411 = vmatpush.xpose.msra.mxu0 0.0
  %412 = vmatpush.xpose.msra.mxu0 0.0
  %413 = vmatpush.xpose.msra.mxu0 0.0
  %414 = vmatpush.xpose.msra.mxu0 0.0
  %415 = vmatpush.xpose.msra.mxu0 0.0
  %416 = vmatpush.xpose.msra.mxu0 0.0
  %417 = vmatpush.xpose.msra.mxu0 0.0
  %418 = vmatpush.xpose.msra.mxu0 0.0
  %419 = vmatpush.xpose.msra.mxu0 0.0
  %420 = vmatpush.xpose.msra.mxu0 0.0
  %421 = vmatpush.xpose.msra.mxu0 0.0
  %422 = vmatpush.xpose.msra.mxu0 0.0
  %423 = vmatpush.xpose.msra.mxu0 0.0
  %424 = vmatpush.xpose.msra.mxu0 0.0
  %425 = vmatpush.xpose.msra.mxu0 0.0
  %426 = vmatpush.xpose.msra.mxu0 %v409
  %427 = vmatmul.f32.gmra.mxu0 %v403
  %v428 = vpop.f32.mrf.mxu0
  %v429 = vadd.f32 0.0, %v428
  %430 = vmatmul.f32.gmra.mxu0 %v406
  %v431 = vpop.f32.mrf.mxu0
  %v432 = vadd.f32 0.0, %v431
  %433 = vdwg.mxu0
  %434 = vst.msk [vmem:[%s1] sm:$0xff] %vm261, %v333
  %435 = vst.msk [vmem:[%s1 + $0x8] sm:$0xff] %vm261, %v336
  %436 = vst.msk [vmem:[%s1 + $0x10] sm:$0xff] %vm261, %v365
  %437 = vst.msk [vmem:[%s1 + $0x18] sm:$0xff] %vm261, %v368
  %438 = vst.msk [vmem:[%s1 + $0x20] sm:$0xff] %vm261, %v397
  %439 = vst.msk [vmem:[%s1 + $0x28] sm:$0xff] %vm261, %v400
  %440 = vst.msk [vmem:[%s1 + $0x30] sm:$0xff] %vm261, %v429
  %441 = vst.msk [vmem:[%s1 + $0x38] sm:$0xff] %vm261, %v432
  // Predicated region
  $region6: #{tpu_custom_call.1} parent=0 // pred_check
    _
  $region7: #{tpu_custom_call.1} parent=0 // pred_check_branch
    %443 = sbr.rel (0) target = $region9
  $region8: #{tpu_custom_call.1} parent=0 // pred_region
    _
  $region9: #{tpu_custom_call.1} parent=0 // pred_fallthru
    _
  // Predicated region
  $region10: #{tpu_custom_call.1} parent=0 // pred_check
    _
  $region11: #{tpu_custom_call.1} parent=0 // pred_check_branch
    %445 = sbr.rel (0) target = $region13
  $region12: #{tpu_custom_call.1} parent=0 // pred_region
    _
  $region13: #{tpu_custom_call.1} parent=0 // pred_fallthru
    _

</llo_original>
